<compile_context>
chip_gen: v7x
topology: tpu7x:2x2x1
jax: 0.10.0
libtpu: 0.0.40
codegen_flags: <defaults>
</compile_context>

<pallas_src>
import functools
import math

import jax
import jax.numpy as jnp
from jax import lax
from jax.experimental import pallas as pl
from jax.experimental.pallas import tpu as pltpu

_EPS = 1e-7
_LOG_EPS = math.log(_EPS)            # log(0 + 1e-7)
_LOG_1P_EPS = math.log(1.0 + _EPS)   # log(1 + 1e-7)


def _round_up(a, b):
    return (a + b - 1) // b * b


def _vmem_capacity_bytes():
    """Physical VMEM per TensorCore; conservative (v7x, 64 MiB) fallback."""
    try:
        info = pltpu.get_tpu_info()
        cap = getattr(info, "vmem_capacity_bytes", None)
        if cap:
            return int(cap)
    except Exception:
        pass
    return 64 << 20


def _fsce_kernel(x_ref, lab_ref, cw_ref, out_ref, *, gamma, n_valid, block_cols):
    """One batch tile, class-major layout.

    x_ref  : (C, TB) f32 logits (classes on sublanes, batch rows on lanes)
    lab_ref: (1, TB) i32 labels
    cw_ref : (C, 1)  f32 per-class weights (grid-invariant / resident)
    out_ref: (1, 128) f32 partials: lane 0 = sum(focal*w), lane 1 = sum(rce*w)
    """
    i = pl.program_id(0)

    x = x_ref[...]                                                  # (C, TB)
    labels = lab_ref[...]                                           # (1, TB)
    cw = cw_ref[...]                                                # (C, 1)
    c, tb = x.shape

    # Mask batch columns that only exist because of padding to a tile multiple.
    col = i * block_cols + lax.broadcasted_iota(jnp.int32, (1, tb), 1)
    valid = (col < n_valid).astype(jnp.float32)                     # (1, TB)

    # Softmax over classes (sublane axis).
    m = jnp.max(x, axis=0, keepdims=True)                           # (1, TB)
    e = jnp.exp(x - m)                                              # (C, TB)
    s = jnp.sum(e, axis=0, keepdims=True)                           # (1, TB)

    one_hot = (lax.broadcasted_iota(jnp.int32, (c, tb), 0)
               == labels).astype(jnp.float32)                       # (C, TB)

    # pt = clamp(softmax, 1e-7, 1)[label]; one exact divide on (1, TB) only.
    e_lab = jnp.sum(one_hot * e, axis=0, keepdims=True)             # (1, TB)
    pt = jnp.maximum(e_lab / s, _EPS)                               # (1, TB)

    # ce = -sum(one_hot * log(p)) == -log(pt): one log per sample, not per class.
    ce = -jnp.log(pt)

    g = float(gamma)
    base = 1.0 - pt
    if g == int(g):
        focal_w = lax.integer_pow(base, int(g))
    else:
        # non-integer gamma: pow via exp/log with a tiny floor on the base
        focal_w = jnp.exp(g * jnp.log(jnp.maximum(base, 1e-30)))
    focal_ce = focal_w * ce                                         # (1, TB)

    # rce = -sum(clamp(p) * log(one_hot + eps))
    #     = -((log(1+eps) - log(eps)) * pt + log(eps) * S),
    # with S = sum_c clamp(p_c, eps, 1) = 1 + sum_c relu(eps - p_c).
    # The full p is only needed for that ~1e-7-scale correction, so the approx
    # reciprocal (EUP vrcp, free bundle slot) is plenty accurate here.
    p = e * pl.reciprocal(s, approx=True)                           # (C, TB)
    s_clip = 1.0 + jnp.sum(jnp.maximum(_EPS - p, 0.0), axis=0, keepdims=True)
    rce = -((_LOG_1P_EPS - _LOG_EPS) * pt + _LOG_EPS * s_clip)      # (1, TB)

    # Per-sample class weight (gather via one-hot), zeroed on padded columns.
    w = jnp.sum(one_hot * cw, axis=0, keepdims=True) * valid        # (1, TB)

    f_part = jnp.sum(focal_ce * w, axis=1, keepdims=True)           # (1, 1)
    r_part = jnp.sum(rce * w, axis=1, keepdims=True)                # (1, 1)

    # Lane-dense (1, 128) partial-sum block for this tile.
    lane = lax.broadcasted_iota(jnp.int32, (1, 128), 1)
    out_ref[...] = jnp.where(lane == 0, f_part,
                             jnp.where(lane == 1, r_part, 0.0))


def focal_symmetric_cross_entropy(pred, labels, *, alpha=0.1, beta=1.0,
                                  gamma=2.0, class_weights=None,
                                  target_tile_bytes=2 << 20):
    """Pallas forward of FocalSymmetricCrossEntropy.

    pred: [B, C] logits, labels: [B] int class ids. Returns a scalar loss.
    """
    pred = jnp.asarray(pred, jnp.float32)
    B, C = pred.shape
    labels = jnp.asarray(labels, jnp.int32).reshape(B)
    if class_weights is None:
        cw = jnp.ones((C, 1), jnp.float32)
    else:
        cw = jnp.asarray(class_weights, jnp.float32).reshape(C, 1)

    # --- batch-tile sizing: byte budgeted, generation aware ------------------
    c_sub = _round_up(C, 8)                       # sublane-padded class rows
    # bytes per batch column per grid step (double-buffered logits + labels)
    bytes_per_col = 2 * c_sub * 4 + 2 * 8 * 4
    vmem_cap = _vmem_capacity_bytes()
    vmem_budget = min(int(vmem_cap * 0.6), 40 << 20)   # stay safe on v7x 64 MiB

    b128 = _round_up(B, 128)
    tb = int(target_tile_bytes) // (c_sub * 4)    # ~target bytes of logits/step
    tb = min(tb, vmem_budget // bytes_per_col)    # stay inside VMEM budget
    tb = max(128, tb // 128 * 128)
    tb = min(tb, b128)
    if b128 >= 256:
        # Guarantee >= 2 grid tiles so the "parallel" axis can shard across
        # both TensorCores on v7x megacore.
        tb = min(tb, _round_up(b128 // 2, 128))
    # TODO(synk): very large num_classes would additionally need class-axis
    # tiling with an online softmax to keep the (C, tb) block inside v7x VMEM.

    b_pad = _round_up(B, tb)
    num_tiles = b_pad // tb

    # Class-major layout: batch rows on lanes, classes on sublanes.
    pred_cm = jnp.pad(pred, ((0, b_pad - B), (0, 0))).T             # (C, b_pad)
    labels_cm = jnp.pad(labels, (0, b_pad - B)).reshape(1, b_pad)   # (1, b_pad)

    vmem_est = (2 * c_sub * tb * 4        # logits tile, double buffered
                + 2 * 8 * tb * 4          # labels tile (8 sublanes), dbl-buf
                + c_sub * 128 * 4         # resident class-weight column
                + 2 * 8 * 128 * 4)        # output partial block
    vmem_limit = int(min(vmem_cap - (8 << 20),
                         max(32 << 20, vmem_est + (8 << 20))))

    kernel = functools.partial(_fsce_kernel, gamma=float(gamma), n_valid=B,
                               block_cols=tb)

    parts = pl.pallas_call(
        kernel,
        out_shape=jax.ShapeDtypeStruct((1, num_tiles * 128), jnp.float32),
        grid_spec=pltpu.PrefetchScalarGridSpec(
            num_scalar_prefetch=0,
            grid=(num_tiles,),
            in_specs=[
                pl.BlockSpec((C, tb), lambda i: (0, i)),    # logits tile
                pl.BlockSpec((1, tb), lambda i: (0, i)),    # labels tile
                pl.BlockSpec((C, 1), lambda i: (0, 0)),     # class weights
            ],
            out_specs=pl.BlockSpec((1, 128), lambda i: (0, i)),
        ),
        compiler_params=pltpu.CompilerParams(
            dimension_semantics=("parallel",),
            vmem_limit_bytes=vmem_limit,
        ),
    )(pred_cm, labels_cm, cw)

    parts = parts.reshape(num_tiles, 128)
    focal_sum = jnp.sum(parts[:, 0])
    rce_sum = jnp.sum(parts[:, 1])
    return (float(alpha) * focal_sum + float(beta) * rce_sum) / B


def fsce_reference(pred, labels, *, alpha=0.1, beta=1.0, gamma=2.0,
                   class_weights=None):
    num_classes = pred.shape[1]
    p = jax.nn.softmax(pred, axis=1)
    p = jnp.clip(p, _EPS, 1.0)
    one_hot = jax.nn.one_hot(labels, num_classes, dtype=jnp.float32)
    ce = -jnp.sum(one_hot * jnp.log(p), axis=1)
    pt = jnp.sum(one_hot * p, axis=1)
    focal_ce = (1.0 - pt) ** gamma * ce
    rce = -jnp.sum(p * jnp.log(one_hot + _EPS), axis=1)
    if class_weights is not None:
        w = jnp.asarray(class_weights, jnp.float32)[labels]
        focal_ce = focal_ce * w
        rce = rce * w
    return alpha * jnp.mean(focal_ce) + beta * jnp.mean(rce)


if __name__ == "__main__":
    key = jax.random.PRNGKey(0)
    k_pred, k_lab, k_pred2, k_lab2 = jax.random.split(key, 4)

    # Module default: num_classes=6. Small batch.
    B, C = 64, 6
    pred = jax.random.normal(k_pred, (B, C), dtype=jnp.float32) * 2.0
    labels = jax.random.randint(k_lab, (B,), 0, C, dtype=jnp.int32)

    loss = jax.block_until_ready(focal_symmetric_cross_entropy(pred, labels))
    ref = fsce_reference(pred, labels)
    assert loss.shape == ()
    assert jnp.allclose(loss, ref, atol=1e-4, rtol=1e-4), (loss, ref)

    # With per-class weights.
    cw = jnp.array([1.0, 2.0, 0.5, 1.5, 1.0, 3.0], dtype=jnp.float32)
    loss_w = jax.block_until_ready(
        focal_symmetric_cross_entropy(pred, labels, class_weights=cw))
    ref_w = fsce_reference(pred, labels, class_weights=cw)
    assert jnp.allclose(loss_w, ref_w, atol=1e-4, rtol=1e-4), (loss_w, ref_w)

    # Non-tile-multiple batch -> exercises padding mask + multi-tile grid.
    B2 = 300
    pred2 = jax.random.normal(k_pred2, (B2, C), dtype=jnp.float32) * 2.0
    labels2 = jax.random.randint(k_lab2, (B2,), 0, C, dtype=jnp.int32)
    loss2 = jax.block_until_ready(
        focal_symmetric_cross_entropy(pred2, labels2, class_weights=cw))
    ref2 = fsce_reference(pred2, labels2, class_weights=cw)
    assert jnp.allclose(loss2, ref2, atol=1e-4, rtol=1e-4), (loss2, ref2)

    print("KERNEL_OK")
</pallas_src>

<mosaic_0001>
module attributes {stable_mosaic.version = 11 : i64} {
  func.func @_fsce_kernel(%arg0: i32, %arg1: memref<6x128xf32, #tpu.memory_space<vmem>>, %arg2: memref<1x128xi32, #tpu.memory_space<vmem>>, %arg3: memref<6x1xf32, #tpu.memory_space<vmem>>, %arg4: memref<1x128xf32, #tpu.memory_space<vmem>>) attributes {dimension_semantics = [#tpu.dimension_semantics<parallel>], iteration_bounds = array<i64: 1>, scalar_prefetch = 0 : i64, scratch_operands = 0 : i64, tpu.core_type = #tpu.core_type<tc>, window_params = [{transform_indices = @transform_0, window_bounds = array<i64: 6, 128>}, {transform_indices = @transform_1, window_bounds = array<i64: 1, 128>}, {pipeline_mode = #tpu.pipeline_mode<synchronous>, transform_indices = @transform_2, window_bounds = array<i64: 6, 1>}, {transform_indices = @transform_3, window_bounds = array<i64: 1, 128>}]} {
    %c0 = arith.constant 0 : index
    %c0_0 = arith.constant 0 : index
    %0 = vector.load %arg1[%c0, %c0_0] : memref<6x128xf32, #tpu.memory_space<vmem>>, vector<6x128xf32>
    %c0_1 = arith.constant 0 : index
    %c0_2 = arith.constant 0 : index
    %1 = vector.load %arg2[%c0_1, %c0_2] : memref<1x128xi32, #tpu.memory_space<vmem>>, vector<1x128xi32>
    %c0_3 = arith.constant 0 : index
    %c0_4 = arith.constant 0 : index
    %2 = vector.load %arg3[%c0_3, %c0_4] : memref<6x1xf32, #tpu.memory_space<vmem>>, vector<6x1xf32>
    %c128_i32 = arith.constant 128 : i32
    %3 = arith.muli %arg0, %c128_i32 : i32
    %4 = tpu.iota {dimensions = array<i32: 1>} : vector<1x128xi32>
    %5 = vector.broadcast %3 : i32 to vector<1x128xi32>
    %6 = arith.addi %5, %4 : vector<1x128xi32>
    %c64_i32 = arith.constant 64 : i32
    %7 = vector.broadcast %c64_i32 : i32 to vector<1x128xi32>
    %8 = arith.cmpi slt, %6, %7 : vector<1x128xi32>
    %9 = arith.extui %8 : vector<1x128xi1> to vector<1x128xi32>
    %10 = arith.sitofp %9 : vector<1x128xi32> to vector<1x128xf32>
    %cst = arith.constant dense<0xFF800000> : vector<128xf32>
    %11 = vector.multi_reduction <maximumf>, %0, %cst [0] : vector<6x128xf32> to vector<128xf32>
    %12 = vector.shape_cast %11 : vector<128xf32> to vector<1x128xf32>
    %13 = vector.broadcast %12 : vector<1x128xf32> to vector<6x128xf32>
    %14 = arith.subf %0, %13 : vector<6x128xf32>
    %15 = math.exp %14 : vector<6x128xf32>
    %cst_5 = arith.constant dense<0.000000e+00> : vector<128xf32>
    %16 = vector.multi_reduction <add>, %15, %cst_5 [0] : vector<6x128xf32> to vector<128xf32>
    %17 = vector.shape_cast %16 : vector<128xf32> to vector<1x128xf32>
    %18 = tpu.iota {dimensions = array<i32: 0>} : vector<6x128xi32>
    %19 = vector.broadcast %1 : vector<1x128xi32> to vector<6x128xi32>
    %20 = arith.cmpi eq, %18, %19 : vector<6x128xi32>
    %21 = arith.extui %20 : vector<6x128xi1> to vector<6x128xi32>
    %22 = arith.sitofp %21 : vector<6x128xi32> to vector<6x128xf32>
    %23 = arith.mulf %22, %15 : vector<6x128xf32>
    %cst_6 = arith.constant dense<0.000000e+00> : vector<128xf32>
    %24 = vector.multi_reduction <add>, %23, %cst_6 [0] : vector<6x128xf32> to vector<128xf32>
    %25 = vector.shape_cast %24 : vector<128xf32> to vector<1x128xf32>
    %26 = arith.divf %25, %17 : vector<1x128xf32>
    %cst_7 = arith.constant 1.000000e-07 : f32
    %27 = vector.broadcast %cst_7 : f32 to vector<1x128xf32>
    %28 = arith.maximumf %26, %27 : vector<1x128xf32>
    %29 = math.log %28 : vector<1x128xf32>
    %cst_8 = arith.constant 0.000000e+00 : f32
    %30 = vector.broadcast %cst_8 : f32 to vector<1x128xf32>
    %31 = arith.subf %30, %29 : vector<1x128xf32>
    %cst_9 = arith.constant 1.000000e+00 : f32
    %32 = vector.broadcast %cst_9 : f32 to vector<1x128xf32>
    %33 = arith.subf %32, %28 : vector<1x128xf32>
    %34 = arith.mulf %33, %33 : vector<1x128xf32>
    %35 = arith.mulf %34, %31 : vector<1x128xf32>
    %36 = tpu.reciprocal %17 {approx = true} : vector<1x128xf32> -> vector<1x128xf32>
    %37 = vector.broadcast %36 : vector<1x128xf32> to vector<6x128xf32>
    %38 = arith.mulf %15, %37 : vector<6x128xf32>
    %cst_10 = arith.constant 1.000000e-07 : f32
    %39 = vector.broadcast %cst_10 : f32 to vector<6x128xf32>
    %40 = arith.subf %39, %38 : vector<6x128xf32>
    %cst_11 = arith.constant 0.000000e+00 : f32
    %41 = vector.broadcast %cst_11 : f32 to vector<6x128xf32>
    %42 = arith.maximumf %40, %41 : vector<6x128xf32>
    %cst_12 = arith.constant dense<0.000000e+00> : vector<128xf32>
    %43 = vector.multi_reduction <add>, %42, %cst_12 [0] : vector<6x128xf32> to vector<128xf32>
    %44 = vector.shape_cast %43 : vector<128xf32> to vector<1x128xf32>
    %cst_13 = arith.constant 1.000000e+00 : f32
    %45 = vector.broadcast %cst_13 : f32 to vector<1x128xf32>
    %46 = arith.addf %45, %44 : vector<1x128xf32>
    %cst_14 = arith.constant 16.1180954 : f32
    %47 = vector.broadcast %cst_14 : f32 to vector<1x128xf32>
    %48 = arith.mulf %47, %28 : vector<1x128xf32>
    %cst_15 = arith.constant -16.1180954 : f32
    %49 = vector.broadcast %cst_15 : f32 to vector<1x128xf32>
    %50 = arith.mulf %49, %46 : vector<1x128xf32>
    %51 = arith.addf %48, %50 : vector<1x128xf32>
    %cst_16 = arith.constant 0.000000e+00 : f32
    %52 = vector.broadcast %cst_16 : f32 to vector<1x128xf32>
    %53 = arith.subf %52, %51 : vector<1x128xf32>
    %54 = vector.broadcast %2 : vector<6x1xf32> to vector<6x128xf32>
    %55 = arith.mulf %22, %54 : vector<6x128xf32>
    %cst_17 = arith.constant dense<0.000000e+00> : vector<128xf32>
    %56 = vector.multi_reduction <add>, %55, %cst_17 [0] : vector<6x128xf32> to vector<128xf32>
    %57 = vector.shape_cast %56 : vector<128xf32> to vector<1x128xf32>
    %58 = arith.mulf %57, %10 : vector<1x128xf32>
    %59 = arith.mulf %35, %58 : vector<1x128xf32>
    %cst_18 = arith.constant dense<0.000000e+00> : vector<1xf32>
    %60 = vector.multi_reduction <add>, %59, %cst_18 [1] : vector<1x128xf32> to vector<1xf32>
    %61 = vector.shape_cast %60 : vector<1xf32> to vector<1x1xf32>
    %62 = arith.mulf %53, %58 : vector<1x128xf32>
    %cst_19 = arith.constant dense<0.000000e+00> : vector<1xf32>
    %63 = vector.multi_reduction <add>, %62, %cst_19 [1] : vector<1x128xf32> to vector<1xf32>
    %64 = vector.shape_cast %63 : vector<1xf32> to vector<1x1xf32>
    %65 = tpu.iota {dimensions = array<i32: 1>} : vector<1x128xi32>
    %c0_i32 = arith.constant 0 : i32
    %66 = vector.broadcast %c0_i32 : i32 to vector<1x128xi32>
    %67 = arith.cmpi eq, %65, %66 : vector<1x128xi32>
    %c1_i32 = arith.constant 1 : i32
    %68 = vector.broadcast %c1_i32 : i32 to vector<1x128xi32>
    %69 = arith.cmpi eq, %65, %68 : vector<1x128xi32>
    %cst_20 = arith.constant 0.000000e+00 : f32
    %70 = vector.shape_cast %64 : vector<1x1xf32> to vector<1x1xf32>
    %71 = vector.broadcast %70 : vector<1x1xf32> to vector<1x128xf32>
    %72 = vector.broadcast %cst_20 : f32 to vector<1x128xf32>
    %73 = arith.select %69, %71, %72 : vector<1x128xi1>, vector<1x128xf32>
    %74 = vector.shape_cast %61 : vector<1x1xf32> to vector<1x1xf32>
    %75 = vector.broadcast %74 : vector<1x1xf32> to vector<1x128xf32>
    %76 = arith.select %67, %75, %73 : vector<1x128xi1>, vector<1x128xf32>
    %c0_21 = arith.constant 0 : index
    %c0_22 = arith.constant 0 : index
    %77 = vector.load %arg4[%c0_21, %c0_22] : memref<1x128xf32, #tpu.memory_space<vmem>>, vector<1x128xf32>
    tpu.vector_store %arg4[%c0_21, %c0_22], %76 {strides = array<i32>} : memref<1x128xf32, #tpu.memory_space<vmem>>, vector<1x128xf32>,
    return
  }
  func.func @transform_0(%arg0: i32) -> (i32, i32) {
    %c0_i32 = arith.constant 0 : i32
    %c0_i32_0 = arith.constant 0 : i32
    return %c0_i32, %arg0 : i32, i32
  }
  func.func @transform_1(%arg0: i32) -> (i32, i32) {
    %c0_i32 = arith.constant 0 : i32
    %c0_i32_0 = arith.constant 0 : i32
    return %c0_i32, %arg0 : i32, i32
  }
  func.func @transform_2(%arg0: i32) -> (i32, i32) {
    %c0_i32 = arith.constant 0 : i32
    %c0_i32_0 = arith.constant 0 : i32
    %c0_i32_1 = arith.constant 0 : i32
    return %c0_i32, %c0_i32_0 : i32, i32
  }
  func.func @transform_3(%arg0: i32) -> (i32, i32) {
    %c0_i32 = arith.constant 0 : i32
    %c0_i32_0 = arith.constant 0 : i32
    return %c0_i32, %arg0 : i32, i32
  }
}

</mosaic_0001>

<llo_original>
// kernel: tpu_custom_call.1
$region0: #{tpu_custom_call.1}
  #allocation0 [shape = 'u32[]', space=smem, size = 0x4, offset = 0x4, fixed_abs, tag = 'smem constant byte address 0x4 - core index']
  #allocation1 [shape = 'u32[144,128]{1,0:T(1,128)}', space=vmem, size = 0x12000, scoped, tag = 'internal scratch']
  %s0 = inlined_call_operand.vmem [shape: f32[6,128], index: 0, kind: input, shape index: {}]
  %s1 = inlined_call_operand.vmem [shape: s32[1,128], index: 1, kind: input, shape index: {}]
  %s2 = inlined_call_operand.vmem [shape: f32[6,1], index: 2, kind: input, shape index: {}]
  %s3 = inlined_call_operand.hbm [shape: f32[1,128], index: 3, kind: output, shape index: {}]
  %s4 = sld [smem:[#allocation0]]
  $region22: #{tpu_custom_call.1} parent=0
    _
  %s6 = ssub.s32 1, %s4
  %s7 = scalar_select 0, %s6, %s4
  $region1: #{tpu_custom_call.1} parent=0
    #allocation2 [shape = 'u8[512]{0}', space=vmem, size = 0x400, scoped, tag = 'output window, operand 0, single buffered']
    #allocation3 [shape = 's32[1]{0}', space=sflag, size = 0x4, scoped, tag = 'scoped memory for tpu_custom_call.1']
    %8 = vsyncpa [#allocation3], 0
    // Predicated region
    $region2: #{tpu_custom_call.1} parent=1 // pred_check
      _
    $region3: #{tpu_custom_call.1} parent=1 // pred_check_branch
      %10 = sbr.rel (0) target = $region5
    $region4: #{tpu_custom_call.1} parent=1 // pred_region
      _
    $region5: #{tpu_custom_call.1} parent=1 // pred_fallthru
      _
    // Predicated region
    $region6: #{tpu_custom_call.1} parent=1 // pred_check
      _
    $region7: #{tpu_custom_call.1} parent=1 // pred_check_branch
      %12 = sbr.rel (0) target = $region9
    $region8: #{tpu_custom_call.1} parent=1 // pred_region
      _
    $region9: #{tpu_custom_call.1} parent=1 // pred_fallthru
      _
    // Predicated region
    $region10: #{tpu_custom_call.1} parent=1 // pred_check
      _
    $region11: #{tpu_custom_call.1} parent=1 // pred_check_branch
      %14 = sbr.rel (0) target = $region13
    $region12: #{tpu_custom_call.1} parent=1 // pred_region
      _
    $region13: #{tpu_custom_call.1} parent=1 // pred_fallthru
      _
    %v15 = vld [vmem:[%s0] sm:$0x3f]
    %v16 = vld [vmem:[%s1] sm:$0x1]
    %v17 = vld [vmem:[%s2] sm:$0x3f]
    %s18 = smul.u32 0, 128
    %v19 = vlaneseq
    %v20 = vand.u32 %v19, 127
    %v21 = vstv %s18
    %v22 = vadd.s32 %v21, %v20
    %vm23 = vcmp.lt.s32.totalorder %v22, 64
    %v24 = vsel %vm23, 1, 0
    %v25 = vcvt.s32.f32 %v24
    %vm26 = vcmask 1045504
    %v27 = vsel %vm26, %v15, -inf
    %v28 = vrot.slane %v27, 4
    %v29 = vmax.f32 %v27, %v28
    %v30 = vrot.slane %v29, 2
    %v31 = vmax.f32 %v29, %v30
    %v32 = vrot.slane %v31, 1
    %v33 = vmax.f32 %v31, %v32
    %v34 = vsub.f32 %v15, %v33
    %v35 = vmul.f32 %v34, 1.442695
    %v36 = vpow.pop %v35
    %v37 = vsel %vm26, %v36, 0.0
    %v38 = vrot.slane %v37, 4
    %v39 = vadd.f32 %v37, %v38
    %v40 = vrot.slane %v39, 2
    %v41 = vadd.f32 %v39, %v40
    %v42 = vrot.slane %v41, 1
    %v43 = vadd.f32 %v41, %v42
    %v44 = vlaneseq
    %v45 = vshrl.u32 %v44, 7
    %v46 = vlaneseq
    %v47 = vshrl.u32 %v46, 7
    %v48 = vsub.s32 0, %v47
    %v49 = vrot.slane %v16, %v48
    %vm50 = vcmp.eq.s32.totalorder %v45, %v49
    %v51 = vsel %vm50, 1, 0
    %v52 = vcvt.s32.f32 %v51
    %v53 = vmul.f32 %v52, %v36
    %v54 = vsel %vm26, %v53, 0.0
    %v55 = vrot.slane %v54, 4
    %v56 = vadd.f32 %v54, %v55
    %v57 = vrot.slane %v56, 2
    %v58 = vadd.f32 %v56, %v57
    %v59 = vrot.slane %v58, 1
    %v60 = vadd.f32 %v58, %v59
    %v61 = vrcp.pop %v43
    %v62 = vmul.f32 %v60, %v61
    %v63 = vmax.f32 %v62, 1e-07
    %v64 = vlog2.pop %v63
    %v65 = vmul.f32 %v64, 0.6931472
    %v66 = vsub.f32 0.0, %v65
    %v67 = vsub.f32 1.0, %v63
    %v68 = vmul.f32 %v67, %v67
    %v69 = vmul.f32 %v68, %v66
    %v70 = vrcp.pop %v43
    %v71 = vmul.f32 %v36, %v70
    %v72 = vsub.f32 1e-07, %v71
    %v73 = vmax.f32 %v72, 0.0
    %v74 = vsel %vm26, %v73, 0.0
    %v75 = vrot.slane %v74, 4
    %v76 = vadd.f32 %v74, %v75
    %v77 = vrot.slane %v76, 2
    %v78 = vadd.f32 %v76, %v77
    %v79 = vrot.slane %v78, 1
    %v80 = vadd.f32 %v78, %v79
    %v81 = vadd.f32 %v80, 1.0
    %v82 = vmul.f32 %v63, 16.118095
    %v83 = vmul.f32 %v81, -16.118095
    %v84 = vadd.f32 %v82, %v83
    %v85 = vsub.f32 0.0, %v84
    %87 = vset.pattern.permute.xlu0 0
    %88 = vperm.xlu0 %87, %v17
    %v89 = vpop.permute.xlu0 %88
    %v91 = vmul.f32 %v52, %v89
    %v92 = vsel %vm26, %v91, 0.0
    %v93 = vrot.slane %v92, 4
    %v94 = vadd.f32 %v92, %v93
    %v95 = vrot.slane %v94, 2
    %v96 = vadd.f32 %v94, %v95
    %v97 = vrot.slane %v96, 1
    %v98 = vadd.f32 %v96, %v97
    %v99 = vmul.f32 %v98, %v25
    %v100 = vmul.f32 %v69, %v99
    %101 = vadd.xlane.f32.xlu0 %v100
    %v102 = vpop.xlane.xlu0 %101
    %v103 = vmul.f32 %v85, %v99
    %104 = vadd.xlane.f32.xlu0 %v103
    %v105 = vpop.xlane.xlu0 %104
    %vm106 = vcmp.eq.s32.totalorder %v20, 0
    %vm107 = vcmp.eq.s32.totalorder %v20, 1
    %v108 = vsel %vm107, %v105, 0.0
    %v109 = vsel %vm106, %v102, %v108
    %110 = vst [vmem:[#allocation2] sm:$0x1] %v109
    // Predicated region
    $region14: #{tpu_custom_call.1} parent=1 // pred_check
      _
    $region15: #{tpu_custom_call.1} parent=1 // pred_check_branch
      %112 = sbr.rel (0) target = $region17
    $region16: #{tpu_custom_call.1} parent=1 // pred_region
      %s114 = ssub.s32 16, 16
      %115 = vsyncadd [#allocation3], %s114
      %s117 = sshll.u32 [#allocation2], 4
      %s118 = int_to_ptr.vmem [resolvable:$true] %s117
      %120 = dma.vmem_to_hbm [thread:$0]  %s118, 16, %s3, [#allocation3]
    $region17: #{tpu_custom_call.1} parent=1 // pred_fallthru
      _
    // Predicated region
    $region18: #{tpu_custom_call.1} parent=1 // pred_check
      _
    $region19: #{tpu_custom_call.1} parent=1 // pred_check_branch
      %122 = sbr.rel (0) target = $region21
    $region20: #{tpu_custom_call.1} parent=1 // pred_region
      %123 = dma.done [#allocation3], 16
    $region21: #{tpu_custom_call.1} parent=1 // pred_fallthru
      _
    %124 = vsyncpa [#allocation3], 1

</llo_original>
